<compile_context>
chip_gen: v7x
topology: tpu7x:2x2x1
jax: 0.10.0
libtpu: 0.0.40
codegen_flags: <defaults>
</compile_context>

<pallas_src>
import functools

import jax
import jax.numpy as jnp
from jax.experimental import pallas as pl
from jax.experimental.pallas import tpu as pltpu


def _round_up(v, m):
    return ((v + m - 1) // m) * m


# ---------------------------------------------------------------------------
# Kernel: one fused matmul + bias per ROI tile.
# ---------------------------------------------------------------------------
def _fused_head_kernel(x_ref, w_ref, b_ref, out_ref):
    # x_ref  : (TILE_N, C_pad)   bf16
    # w_ref  : (C_pad, OUT_pad)  bf16   (resident across the whole grid)
    # b_ref  : (1, OUT_pad)      f32
    # out_ref: (TILE_N, OUT_pad) f32
    acc = jnp.dot(x_ref[...], w_ref[...], preferred_element_type=jnp.float32)
    out_ref[...] = (acc + b_ref[...]).astype(out_ref.dtype)


# ---------------------------------------------------------------------------
# One-time parameter preparation (fusion + transpose + padding + bf16 cast).
# ---------------------------------------------------------------------------
def prepare_fused_params(w_cls, b_cls, w_bbox, b_bbox,
                         compute_dtype=jnp.bfloat16):
    """Fuse the two PyTorch-layout Linear heads into a single padded slab.

    w_cls  : (num_classes, C)      b_cls  : (num_classes,)
    w_bbox : (num_classes*4, C)    b_bbox : (num_classes*4,)
    Returns (w_fused (C_pad, OUT_pad) compute_dtype,
             b_fused (1, OUT_pad) f32,
             num_classes, num_bbox, C)
    """
    num_classes, C = w_cls.shape
    num_bbox = w_bbox.shape[0]
    out_dim = num_classes + num_bbox
    out_pad = _round_up(out_dim, 128)
    c_pad = _round_up(C, 128)

    w = jnp.concatenate([w_cls, w_bbox], axis=0)          # (out_dim, C)
    w_t = jnp.transpose(w)                                 # (C, out_dim)
    w_t = jnp.pad(w_t, ((0, c_pad - C), (0, out_pad - out_dim)))
    b = jnp.concatenate([b_cls, b_bbox], axis=0)
    b = jnp.pad(b, (0, out_pad - out_dim)).reshape(1, out_pad)

    return (w_t.astype(compute_dtype),
            b.astype(jnp.float32),
            num_classes, num_bbox, C)


# ---------------------------------------------------------------------------
# Forward pass.
# ---------------------------------------------------------------------------
@functools.partial(jax.jit, static_argnames=("num_classes", "num_bbox",
                                             "in_channels", "tile_n"))
def fastrcnn_predictor(x, w_fused, b_fused, *, num_classes, num_bbox,
                       in_channels, tile_n=256):
    """FastRCNNPredictor forward.

    x       : (N, C) or (N, C, 1, 1)
    w_fused : (C_pad, OUT_pad)  (from prepare_fused_params, bf16)
    b_fused : (1, OUT_pad)      f32
    Returns (scores (N, num_classes), bbox_deltas (N, num_bbox)) in f32.
    """
    if x.ndim == 4:
        assert x.shape[2] == 1 and x.shape[3] == 1, \
            "4-D input must have spatial dims [1, 1]"
    x2 = x.reshape(x.shape[0], -1)
    N, C = x2.shape
    assert C == in_channels

    c_pad, out_pad = w_fused.shape

    # Tile N. Small N -> single tile rounded to a sublane multiple of 8.
    tn = min(tile_n, _round_up(N, 8))
    n_pad = _round_up(N, tn)

    # Pad x on the ROI and channel axes (zeros are inert for the matmul);
    # no-ops at realistic FastRCNN sizes (C=1024, N a multiple of the tile).
    if (n_pad != N) or (c_pad != C):
        x2 = jnp.pad(x2, ((0, n_pad - N), (0, c_pad - C)))
    xc = x2.astype(w_fused.dtype)

    grid = (n_pad // tn,)

    cost = pl.CostEstimate(
        flops=2 * n_pad * c_pad * out_pad,
        transcendentals=0,
        bytes_accessed=(n_pad * c_pad * xc.dtype.itemsize
                        + c_pad * out_pad * w_fused.dtype.itemsize
                        + out_pad * 4
                        + n_pad * out_pad * 4),
    )

    out = pl.pallas_call(
        _fused_head_kernel,
        out_shape=jax.ShapeDtypeStruct((n_pad, out_pad), jnp.float32),
        grid=grid,
        in_specs=[
            pl.BlockSpec((tn, c_pad), lambda i: (i, 0)),       # x tiles (pipelined)
            pl.BlockSpec((c_pad, out_pad), lambda i: (0, 0)),  # resident weights
            pl.BlockSpec((1, out_pad), lambda i: (0, 0)),      # resident bias
        ],
        out_specs=pl.BlockSpec((tn, out_pad), lambda i: (i, 0)),
        compiler_params=pltpu.CompilerParams(
            dimension_semantics=("parallel",)),
        cost_estimate=cost,
    )(xc, w_fused, b_fused)

    scores = out[:N, :num_classes]
    bbox_deltas = out[:N, num_classes:num_classes + num_bbox]
    return scores, bbox_deltas


# ---------------------------------------------------------------------------
# nn.Linear-style deterministic init (PyTorch layout: (out, in)).
# ---------------------------------------------------------------------------
def init_params(key, in_channels, num_classes):
    k1, k2, k3, k4 = jax.random.split(key, 4)
    bound = 1.0 / (in_channels ** 0.5)
    w_cls = jax.random.uniform(k1, (num_classes, in_channels),
                               jnp.float32, -bound, bound)
    b_cls = jax.random.uniform(k2, (num_classes,), jnp.float32, -bound, bound)
    w_bbox = jax.random.uniform(k3, (num_classes * 4, in_channels),
                                jnp.float32, -bound, bound)
    b_bbox = jax.random.uniform(k4, (num_classes * 4,),
                                jnp.float32, -bound, bound)
    return w_cls, b_cls, w_bbox, b_bbox


if __name__ == "__main__":
    key = jax.random.PRNGKey(0)
    in_channels = 32
    num_classes = 5
    N = 8

    k_x, k_p = jax.random.split(key)
    # Box-head features typically arrive as (N, C, 1, 1).
    x = jax.random.normal(k_x, (N, in_channels, 1, 1), jnp.float32)
    w_cls, b_cls, w_bbox, b_bbox = init_params(k_p, in_channels, num_classes)

    # One-time parameter fusion / padding / bf16 cast.
    w_fused, b_fused, nc, nb, C = prepare_fused_params(
        w_cls, b_cls, w_bbox, b_bbox)

    scores, bbox_deltas = fastrcnn_predictor(
        x, w_fused, b_fused,
        num_classes=nc, num_bbox=nb, in_channels=C)
    jax.block_until_ready((scores, bbox_deltas))

    # Reference in plain JAX: same math as PyTorch nn.Linear, with the same
    # bf16 rounding of x / W (fp32 accumulation) that the kernel performs.
    x2 = x.reshape(N, -1)
    xb = x2.astype(jnp.bfloat16).astype(jnp.float32)
    wc = w_cls.astype(jnp.bfloat16).astype(jnp.float32)
    wb = w_bbox.astype(jnp.bfloat16).astype(jnp.float32)
    ref_scores = xb @ wc.T + b_cls
    ref_bbox = xb @ wb.T + b_bbox

    assert scores.shape == (N, num_classes)
    assert bbox_deltas.shape == (N, num_classes * 4)
    assert jnp.allclose(scores, ref_scores, atol=1e-4, rtol=1e-4)
    assert jnp.allclose(bbox_deltas, ref_bbox, atol=1e-4, rtol=1e-4)
    # Loose check against the pure-fp32 reference (bf16 input rounding only).
    assert jnp.allclose(scores, x2 @ w_cls.T + b_cls, atol=5e-2, rtol=5e-2)
    assert jnp.allclose(bbox_deltas, x2 @ w_bbox.T + b_bbox,
                        atol=5e-2, rtol=5e-2)

    print("KERNEL_OK")
</pallas_src>

<mosaic_0001>
module attributes {stable_mosaic.version = 11 : i64} {
  func.func @_fused_head_kernel(%arg0: i32, %arg1: memref<8x128xbf16, #tpu.memory_space<vmem>>, %arg2: memref<128x128xbf16, #tpu.memory_space<vmem>>, %arg3: memref<1x128xf32, #tpu.memory_space<vmem>>, %arg4: memref<8x128xf32, #tpu.memory_space<vmem>>) attributes {dimension_semantics = [#tpu.dimension_semantics<parallel>], iteration_bounds = array<i64: 1>, scalar_prefetch = 0 : i64, scratch_operands = 0 : i64, tpu.core_type = #tpu.core_type<tc>, window_params = [{transform_indices = @transform_0, window_bounds = array<i64: 8, 128>}, {pipeline_mode = #tpu.pipeline_mode<synchronous>, transform_indices = @transform_1, window_bounds = array<i64: 128, 128>}, {pipeline_mode = #tpu.pipeline_mode<synchronous>, transform_indices = @transform_2, window_bounds = array<i64: 1, 128>}, {transform_indices = @transform_3, window_bounds = array<i64: 8, 128>}]} {
    %c0 = arith.constant 0 : index
    %c0_0 = arith.constant 0 : index
    %0 = vector.load %arg1[%c0, %c0_0] : memref<8x128xbf16, #tpu.memory_space<vmem>>, vector<8x128xbf16>
    %c0_1 = arith.constant 0 : index
    %c0_2 = arith.constant 0 : index
    %1 = vector.load %arg2[%c0_1, %c0_2] : memref<128x128xbf16, #tpu.memory_space<vmem>>, vector<128x128xbf16>
    %cst = arith.constant dense<0.000000e+00> : vector<8x128xf32>
    %2 = tpu.matmul %0, %1, %cst {dimension_numbers = #tpu.dot_dimension_numbers<[1], [0], [0], [1], [0, 0, 1, 1], [], []>} : vector<8x128xbf16>, vector<128x128xbf16>, vector<8x128xf32> -> vector<8x128xf32>
    %c0_3 = arith.constant 0 : index
    %c0_4 = arith.constant 0 : index
    %3 = vector.load %arg3[%c0_3, %c0_4] : memref<1x128xf32, #tpu.memory_space<vmem>>, vector<1x128xf32>
    %4 = vector.broadcast %3 : vector<1x128xf32> to vector<8x128xf32>
    %5 = arith.addf %2, %4 : vector<8x128xf32>
    %c0_5 = arith.constant 0 : index
    %c0_6 = arith.constant 0 : index
    %6 = vector.load %arg4[%c0_5, %c0_6] : memref<8x128xf32, #tpu.memory_space<vmem>>, vector<8x128xf32>
    tpu.vector_store %arg4[%c0_5, %c0_6], %5 {strides = array<i32>} : memref<8x128xf32, #tpu.memory_space<vmem>>, vector<8x128xf32>,
    return
  }
  func.func @transform_0(%arg0: i32) -> (i32, i32) {
    %c0_i32 = arith.constant 0 : i32
    %c0_i32_0 = arith.constant 0 : i32
    return %arg0, %c0_i32 : i32, i32
  }
  func.func @transform_1(%arg0: i32) -> (i32, i32) {
    %c0_i32 = arith.constant 0 : i32
    %c0_i32_0 = arith.constant 0 : i32
    %c0_i32_1 = arith.constant 0 : i32
    return %c0_i32, %c0_i32_0 : i32, i32
  }
  func.func @transform_2(%arg0: i32) -> (i32, i32) {
    %c0_i32 = arith.constant 0 : i32
    %c0_i32_0 = arith.constant 0 : i32
    %c0_i32_1 = arith.constant 0 : i32
    return %c0_i32, %c0_i32_0 : i32, i32
  }
  func.func @transform_3(%arg0: i32) -> (i32, i32) {
    %c0_i32 = arith.constant 0 : i32
    %c0_i32_0 = arith.constant 0 : i32
    return %arg0, %c0_i32 : i32, i32
  }
}

</mosaic_0001>

<llo_original>
// kernel: fastrcnn_predictor.1
$region0: #{fastrcnn_predictor.1}
  #allocation0 [shape = 'u32[]', space=smem, size = 0x4, offset = 0x4, fixed_abs, tag = 'smem constant byte address 0x4 - core index']
  #allocation1 [shape = 'u32[144,128]{1,0:T(1,128)}', space=vmem, size = 0x12000, scoped, tag = 'internal scratch']
  %s0 = inlined_call_operand.vmem [shape: bf16[8,128], index: 0, kind: input, shape index: {}]
  %s1 = inlined_call_operand.hbm [shape: bf16[128,128], index: 1, kind: input, shape index: {}]
  %s2 = inlined_call_operand.vmem [shape: f32[1,128], index: 2, kind: input, shape index: {}]
  %s3 = inlined_call_operand.vmem [shape: f32[8,128], index: 3, kind: output, shape index: {}]
  %s4 = sld [smem:[#allocation0]]
  $region26: #{fastrcnn_predictor.1} parent=0
    _
  %s6 = ssub.s32 1, %s4
  %s7 = scalar_select 0, %s6, %s4
  $region1: #{fastrcnn_predictor.1} parent=0
    #allocation2 [shape = 'u8[32768]{0}', space=vmem, size = 0x8000, scoped, tag = 'input window, operand 1, single buffered']
    #allocation3 [shape = 's32[1]{0}', space=sflag, size = 0x4, scoped, tag = 'scoped memory for fastrcnn_predictor.1']
    %8 = vsyncpa [#allocation3], 0
    // Predicated region
    $region2: #{fastrcnn_predictor.1} parent=1 // pred_check
      _
    $region3: #{fastrcnn_predictor.1} parent=1 // pred_check_branch
      %10 = sbr.rel (0) target = $region5
    $region4: #{fastrcnn_predictor.1} parent=1 // pred_region
      _
    $region5: #{fastrcnn_predictor.1} parent=1 // pred_fallthru
      _
    // Predicated region
    $region6: #{fastrcnn_predictor.1} parent=1 // pred_check
      _
    $region7: #{fastrcnn_predictor.1} parent=1 // pred_check_branch
      %12 = sbr.rel (0) target = $region9
    $region8: #{fastrcnn_predictor.1} parent=1 // pred_region
      %s14 = ssub.s32 1024, 1024
      %15 = vsyncadd [#allocation3], %s14
      %s16 = sshll.u32 [#allocation2], 4
      %s17 = int_to_ptr.vmem [resolvable:$true] %s16
      %22 = dma.hbm_to_vmem [thread:$0]  %s1, 1024, %s17, [#allocation3], 64, 64, 4
    $region9: #{fastrcnn_predictor.1} parent=1 // pred_fallthru
      _
    // Predicated region
    $region10: #{fastrcnn_predictor.1} parent=1 // pred_check
      _
    $region11: #{fastrcnn_predictor.1} parent=1 // pred_check_branch
      %24 = sbr.rel (0) target = $region13
    $region12: #{fastrcnn_predictor.1} parent=1 // pred_region
      _
    $region13: #{fastrcnn_predictor.1} parent=1 // pred_fallthru
      _
    // Predicated region
    $region14: #{fastrcnn_predictor.1} parent=1 // pred_check
      _
    $region15: #{fastrcnn_predictor.1} parent=1 // pred_check_branch
      %26 = sbr.rel (0) target = $region17
    $region16: #{fastrcnn_predictor.1} parent=1 // pred_region
      %27 = dma.done [#allocation3], 1024
    $region17: #{fastrcnn_predictor.1} parent=1 // pred_fallthru
      _
    %v29 = vld [vmem:[%s0] sm:$0xf]
    %v30 = vld [vmem:[#allocation2] sm:$0xf]
    %v31 = vld [vmem:[#allocation2 + $0x4] sm:$0xf]
    %v32 = vld [vmem:[#allocation2 + $0x8] sm:$0xf]
    %v33 = vld [vmem:[#allocation2 + $0xc] sm:$0xf]
    %v34 = vld [vmem:[#allocation2 + $0x10] sm:$0xf]
    %v35 = vld [vmem:[#allocation2 + $0x14] sm:$0xf]
    %v36 = vld [vmem:[#allocation2 + $0x18] sm:$0xf]
    %v37 = vld [vmem:[#allocation2 + $0x1c] sm:$0xf]
    %v38 = vld [vmem:[#allocation2 + $0x20] sm:$0xf]
    %v39 = vld [vmem:[#allocation2 + $0x24] sm:$0xf]
    %v40 = vld [vmem:[#allocation2 + $0x28] sm:$0xf]
    %v41 = vld [vmem:[#allocation2 + $0x2c] sm:$0xf]
    %v42 = vld [vmem:[#allocation2 + $0x30] sm:$0xf]
    %v43 = vld [vmem:[#allocation2 + $0x34] sm:$0xf]
    %v44 = vld [vmem:[#allocation2 + $0x38] sm:$0xf]
    %v45 = vld [vmem:[#allocation2 + $0x3c] sm:$0xf]
    %v46 = vld [vmem:[%s2] sm:$0x1]
    %v48 = vlaneseq
    %v49 = vshrl.u32 %v48, 7
    %v50 = vsub.s32 0, %v49
    %v51 = vrot.slane %v46, %v50
    %v69 = vunpack.c.l.b16 %v30
    %v70 = vunpack.c.l.b16 %v31
    %v71 = vunpack.c.l.b16 %v32
    %v72 = vunpack.c.l.b16 %v33
    %v73 = vunpack.c.l.b16 %v34
    %v74 = vunpack.c.l.b16 %v35
    %v75 = vunpack.c.l.b16 %v36
    %v76 = vunpack.c.l.b16 %v37
    %v77 = vunpack.c.l.b16 %v38
    %v78 = vunpack.c.l.b16 %v39
    %v79 = vunpack.c.l.b16 %v40
    %v80 = vunpack.c.l.b16 %v41
    %v81 = vunpack.c.l.b16 %v42
    %v82 = vunpack.c.l.b16 %v43
    %v83 = vunpack.c.l.b16 %v44
    %v84 = vunpack.c.l.b16 %v45
    %v85 = vpack.c.b16 %v70, %v69
    %v86 = vpack.c.b16 %v72, %v71
    %v87 = vpack.c.b16 %v74, %v73
    %v88 = vpack.c.b16 %v76, %v75
    %v89 = vpack.c.b16 %v78, %v77
    %v90 = vpack.c.b16 %v80, %v79
    %v91 = vpack.c.b16 %v82, %v81
    %v92 = vpack.c.b16 %v84, %v83
    %101 = vmatprep.subr.bf16.mxu0 0
    %102 = vmatpush1.bf16.msra.mxu0 %v85
    %103 = vmatprep.subr.bf16.mxu0 0
    %104 = vmatpush1.bf16.msra.mxu0 %v86
    %105 = vmatprep.subr.bf16.mxu0 0
    %106 = vmatpush1.bf16.msra.mxu0 %v87
    %107 = vmatprep.subr.bf16.mxu0 0
    %108 = vmatpush1.bf16.msra.mxu0 %v88
    %109 = vmatprep.subr.bf16.mxu0 0
    %110 = vmatpush1.bf16.msra.mxu0 %v89
    %111 = vmatprep.subr.bf16.mxu0 0
    %112 = vmatpush1.bf16.msra.mxu0 %v90
    %113 = vmatprep.subr.bf16.mxu0 0
    %114 = vmatpush1.bf16.msra.mxu0 %v91
    %115 = vmatprep.subr.bf16.mxu0 0
    %116 = vmatpush1.bf16.msra.mxu0 %v92
    %117 = vmatprep.subr.bf16.mxu0 0
    %118 = vmatpush1.bf16.msra.mxu0 0
    %119 = vmatprep.subr.bf16.mxu0 0
    %120 = vmatpush1.bf16.msra.mxu0 0
    %121 = vmatprep.subr.bf16.mxu0 0
    %122 = vmatpush1.bf16.msra.mxu0 0
    %123 = vmatprep.subr.bf16.mxu0 0
    %124 = vmatpush1.bf16.msra.mxu0 0
    %125 = vmatprep.subr.bf16.mxu0 0
    %126 = vmatpush1.bf16.msra.mxu0 0
    %127 = vmatprep.subr.bf16.mxu0 0
    %128 = vmatpush1.bf16.msra.mxu0 0
    %129 = vmatprep.subr.bf16.mxu0 0
    %130 = vmatpush1.bf16.msra.mxu0 0
    %131 = vmatprep.subr.bf16.mxu0 0
    %132 = vmatpush1.bf16.msra.mxu0 0
    %133 = vmatprep.mubr.bf16.mxu0 0
    %134 = vmatmul.mubr.bf16.gmra.mrb[0].mxu0 %v29
    %v135 = vpop.f32.mrb[0].mxu0
    %v136 = vadd.f32 %v51, %v135
    %v137 = vpop.f32.mrb[0].mxu0
    %v138 = vpop.f32.mrb[0].mxu0
    %v139 = vpop.f32.mrb[0].mxu0
    %140 = vdwg.mxu0
    %141 = vst [vmem:[%s3] sm:$0xff] %v136
    // Predicated region
    $region18: #{fastrcnn_predictor.1} parent=1 // pred_check
      _
    $region19: #{fastrcnn_predictor.1} parent=1 // pred_check_branch
      %143 = sbr.rel (0) target = $region21
    $region20: #{fastrcnn_predictor.1} parent=1 // pred_region
      _
    $region21: #{fastrcnn_predictor.1} parent=1 // pred_fallthru
      _
    // Predicated region
    $region22: #{fastrcnn_predictor.1} parent=1 // pred_check
      _
    $region23: #{fastrcnn_predictor.1} parent=1 // pred_check_branch
      %145 = sbr.rel (0) target = $region25
    $region24: #{fastrcnn_predictor.1} parent=1 // pred_region
      _
    $region25: #{fastrcnn_predictor.1} parent=1 // pred_fallthru
      _
    %146 = vsyncpa [#allocation3], 1

</llo_original>
